<compile_context>
chip_gen: v6e
topology: v6e:2x2x1
jax: 0.10.0
libtpu: 0.0.40
codegen_flags: <defaults>
</compile_context>

<pallas_src>
import jax
import jax.numpy as jnp
from jax.experimental import pallas as pl
from jax.experimental.pallas import tpu as pltpu


def mlp_kernel(x_ref, w1_ref, w2_ref, b2_ref, w3_ref, b3_ref, o_ref):
    # x_ref : (19, TB) bf16   batch on lanes; row 18 is all ones (bias fold)
    # w1_ref: (64, 19) bf16   last column is b1 (folded layer-1 bias)
    # w2_ref: (32, 64) bf16   b2_ref: (32, 1) f32
    # w3_ref: (32, 1)  f32    b3_ref: (1, 1)  f32
    # o_ref : (1, TB)  f32
    x = x_ref[...]
    # Layer 1 (bias folded into the matmul via the ones row / bias column).
    h1 = jnp.dot(w1_ref[...], x, preferred_element_type=jnp.float32)   # (64, TB)
    # ReLU after the bf16 cast: cast is monotone and preserves 0, so this is
    # numerically identical to ReLU-then-cast but runs on half the vregs.
    h1_bf = jnp.maximum(h1.astype(jnp.bfloat16), jnp.bfloat16(0))      # (64, TB)
    # Layer 2: MXU matmul, f32 bias + ReLU epilogue.
    h2 = jnp.dot(w2_ref[...], h1_bf,
                 preferred_element_type=jnp.float32) + b2_ref[...]     # (32, TB)
    h2 = jnp.maximum(h2, 0.0)
    # Layer 3 (32 -> 1): VPU broadcast multiply + XLU sublane reduce, tanh on EUP.
    h3 = jnp.sum(h2 * w3_ref[...], axis=0, keepdims=True) + b3_ref[...]  # (1, TB)
    o_ref[...] = jnp.tanh(h3)


def pack_params(params):
    """One-time weight packing: fold b1 into W1, cast MXU operands to bf16."""
    w1, b1, w2, b2, w3, b3 = params
    w1_aug = jnp.concatenate([w1, b1.reshape(-1, 1)], axis=1).astype(jnp.bfloat16)  # (64, 19)
    w2_bf = w2.astype(jnp.bfloat16)                       # (32, 64)
    b2_c = b2.reshape(-1, 1).astype(jnp.float32)          # (32, 1)
    w3_c = w3.reshape(1, -1).T.astype(jnp.float32)        # (32, 1)
    b3_c = b3.reshape(1, 1).astype(jnp.float32)           # (1, 1)
    return (w1_aug, w2_bf, b2_c, w3_c, b3_c)


def _round_up(x, m):
    return ((x + m - 1) // m) * m


def _choose_tile(batch, tb):
    """Multiple-of-128 tile; keep >= 2 grid steps when the batch allows (v7x)."""
    b128 = _round_up(batch, 128)
    tb = max(128, (min(tb, b128) // 128) * 128)
    if b128 < 2 * tb and b128 >= 256:
        tb = max(128, ((b128 // 2) // 128) * 128)   # force >= 2 grid steps
    return tb


def pack_input(x, tb):
    """(B, 18) f32 -> (19, B_pad) bf16 with ones row (layout plumbing; hoist upstream)."""
    B = x.shape[0]
    b_pad = _round_up(B, tb)
    ones = jnp.ones((B, 1), x.dtype)
    x_aug = jnp.concatenate([x, ones], axis=1)                     # (B, 19)
    x_aug = jnp.pad(x_aug, ((0, b_pad - B), (0, 0)))               # (B_pad, 19)
    return x_aug.T.astype(jnp.bfloat16)                            # (19, B_pad)


def trading_model18_forward_packed(x_aug_t, packed_params):
    """Fast path. x_aug_t: (19, B_pad) bf16, B_pad a multiple of 128 and of the
    chosen tile; row 18 is all ones. Returns the padded (1, B_pad) f32 slab."""
    w1_aug, w2_bf, b2_c, w3_c, b3_c = packed_params
    b_pad = x_aug_t.shape[1]
    tb = _choose_tile(b_pad, 16384)
    assert b_pad % tb == 0

    const = lambda i: (0, 0)   # weights/biases: same block every step -> resident
    flops = 2 * b_pad * (19 * 64 + 64 * 32 + 32)
    bytes_accessed = (x_aug_t.size * 2 + b_pad * 4
                      + (w1_aug.size + w2_bf.size) * 2
                      + (b2_c.size + w3_c.size + b3_c.size) * 4)

    return pl.pallas_call(
        mlp_kernel,
        out_shape=jax.ShapeDtypeStruct((1, b_pad), jnp.float32),
        grid_spec=pltpu.PrefetchScalarGridSpec(
            num_scalar_prefetch=0,
            grid=(b_pad // tb,),
            in_specs=[
                pl.BlockSpec((19, tb), lambda i: (0, i)),   # x tile (pipelined)
                pl.BlockSpec((64, 19), const),
                pl.BlockSpec((32, 64), const),
                pl.BlockSpec((32, 1), const),
                pl.BlockSpec((32, 1), const),
                pl.BlockSpec((1, 1), const),
            ],
            out_specs=pl.BlockSpec((1, tb), lambda i: (0, i)),
        ),
        compiler_params=pltpu.CompilerParams(
            dimension_semantics=("parallel",),
            vmem_limit_bytes=48 * 1024 * 1024),
        cost_estimate=pl.CostEstimate(
            flops=flops, transcendentals=b_pad, bytes_accessed=bytes_accessed),
    )(x_aug_t, w1_aug, w2_bf, b2_c, w3_c, b3_c)


def trading_model18_forward(x, params, *, tb=16384):
    """Convenience entry matching the torch module: x (B, 18) f32 -> (B, 1) f32."""
    B = x.shape[0]
    tb = _choose_tile(B, tb)
    x_aug_t = pack_input(x, tb)                      # layout plumbing (hoistable)
    packed = pack_params(params)                     # one-time; hoistable
    out_t = trading_model18_forward_packed(x_aug_t, packed)
    # Slice off padding only for the torch-shaped interface; callers that can
    # consume the padded (1, B_pad) slab should use the packed entry point.
    return out_t[0, :B].reshape(B, 1)


def init_params(key):
    # torch.nn.Linear-style init: U(-1/sqrt(fan_in), 1/sqrt(fan_in)), W (out, in).
    def linear(key, fan_in, fan_out):
        kw, kb = jax.random.split(key)
        bound = 1.0 / jnp.sqrt(jnp.float32(fan_in))
        w = jax.random.uniform(kw, (fan_out, fan_in), jnp.float32, -bound, bound)
        b = jax.random.uniform(kb, (fan_out,), jnp.float32, -bound, bound)
        return w, b

    k1, k2, k3 = jax.random.split(key, 3)
    w1, b1 = linear(k1, 18, 64)
    w2, b2 = linear(k2, 64, 32)
    w3, b3 = linear(k3, 32, 1)
    return (w1, b1, w2, b2, w3, b3)


def reference_forward_f32(x, params):
    w1, b1, w2, b2, w3, b3 = params
    h1 = jnp.maximum(x @ w1.T + b1, 0.0)
    h2 = jnp.maximum(h1 @ w2.T + b2, 0.0)
    return jnp.tanh(h2 @ w3.T + b3)


def reference_forward_bf16(x, params):
    # Mirrors the kernel's numerics: bf16 MXU operands with f32 accumulation,
    # b1 folded into the augmented first matmul (so b1 is rounded to bf16),
    # ReLU after the bf16 cast for h1, f32 layer-2 epilogue, f32 final layer
    # as multiply + reduce, f32 tanh.
    w1, b1, w2, b2, w3, b3 = params
    bf = jnp.bfloat16
    ones = jnp.ones((x.shape[0], 1), jnp.float32)
    x_aug = jnp.concatenate([x, ones], axis=1).astype(bf)                 # (B, 19)
    w1_aug = jnp.concatenate([w1, b1.reshape(-1, 1)], axis=1).astype(bf)  # (64, 19)
    h1 = jnp.dot(x_aug, w1_aug.T, preferred_element_type=jnp.float32)
    h1_bf = jnp.maximum(h1.astype(bf), bf(0))
    h2 = jnp.maximum(jnp.dot(h1_bf, w2.T.astype(bf),
                             preferred_element_type=jnp.float32) + b2, 0.0)
    h3 = jnp.sum(h2 * w3.reshape(1, 32), axis=-1, keepdims=True) + b3
    return jnp.tanh(h3)


if __name__ == "__main__":
    key = jax.random.PRNGKey(0)
    kx, kp = jax.random.split(key)
    params = init_params(kp)

    # Small-batch correctness check (single grid step, padded 8 -> 128).
    B = 8
    x = jax.random.normal(kx, (B, 18), jnp.float32)
    out = jax.block_until_ready(trading_model18_forward(x, params))
    assert out.shape == (B, 1)
    assert jnp.allclose(out, reference_forward_bf16(x, params),
                        atol=2e-3, rtol=2e-3), "mismatch vs bf16-matched reference"
    assert jnp.allclose(out, reference_forward_f32(x, params),
                        atol=5e-2, rtol=5e-2), "mismatch vs f32 reference"

    # Non-multiple batch exercising multiple grid steps + tail padding.
    B2 = 1000
    x2 = jax.random.normal(jax.random.PRNGKey(1), (B2, 18), jnp.float32)
    out2 = jax.block_until_ready(trading_model18_forward(x2, params, tb=256))
    assert out2.shape == (B2, 1)
    assert jnp.allclose(out2, reference_forward_bf16(x2, params),
                        atol=2e-3, rtol=2e-3), "mismatch vs reference (gridded)"

    print("KERNEL_OK")
</pallas_src>

<mosaic_0001>
module attributes {stable_mosaic.version = 11 : i64} {
  func.func @mlp_kernel(%arg0: i32, %arg1: memref<19x128xbf16, #tpu.memory_space<vmem>>, %arg2: memref<64x19xbf16, #tpu.memory_space<vmem>>, %arg3: memref<32x64xbf16, #tpu.memory_space<vmem>>, %arg4: memref<32x1xf32, #tpu.memory_space<vmem>>, %arg5: memref<32x1xf32, #tpu.memory_space<vmem>>, %arg6: memref<1x1xf32, #tpu.memory_space<vmem>>, %arg7: memref<1x128xf32, #tpu.memory_space<vmem>>) attributes {dimension_semantics = [#tpu.dimension_semantics<parallel>], iteration_bounds = array<i64: 1>, scalar_prefetch = 0 : i64, scratch_operands = 0 : i64, tpu.core_type = #tpu.core_type<tc>, window_params = [{transform_indices = @transform_0, window_bounds = array<i64: 19, 128>}, {pipeline_mode = #tpu.pipeline_mode<synchronous>, transform_indices = @transform_1, window_bounds = array<i64: 64, 19>}, {pipeline_mode = #tpu.pipeline_mode<synchronous>, transform_indices = @transform_2, window_bounds = array<i64: 32, 64>}, {pipeline_mode = #tpu.pipeline_mode<synchronous>, transform_indices = @transform_3, window_bounds = array<i64: 32, 1>}, {pipeline_mode = #tpu.pipeline_mode<synchronous>, transform_indices = @transform_4, window_bounds = array<i64: 32, 1>}, {pipeline_mode = #tpu.pipeline_mode<synchronous>, transform_indices = @transform_5, window_bounds = array<i64: 1, 1>}, {transform_indices = @transform_6, window_bounds = array<i64: 1, 128>}]} {
    %c0 = arith.constant 0 : index
    %c0_0 = arith.constant 0 : index
    %0 = vector.load %arg1[%c0, %c0_0] : memref<19x128xbf16, #tpu.memory_space<vmem>>, vector<19x128xbf16>
    %c0_1 = arith.constant 0 : index
    %c0_2 = arith.constant 0 : index
    %1 = vector.load %arg2[%c0_1, %c0_2] : memref<64x19xbf16, #tpu.memory_space<vmem>>, vector<64x19xbf16>
    %cst = arith.constant dense<0.000000e+00> : vector<64x128xf32>
    %2 = tpu.matmul %1, %0, %cst {dimension_numbers = #tpu.dot_dimension_numbers<[1], [0], [0], [1], [0, 0, 1, 1], [], []>} : vector<64x19xbf16>, vector<19x128xbf16>, vector<64x128xf32> -> vector<64x128xf32>
    %3 = arith.truncf %2 : vector<64x128xf32> to vector<64x128xbf16>
    %cst_3 = arith.constant 0.000000e+00 : bf16
    %4 = vector.broadcast %cst_3 : bf16 to vector<64x128xbf16>
    %5 = arith.maximumf %3, %4 : vector<64x128xbf16>
    %c0_4 = arith.constant 0 : index
    %c0_5 = arith.constant 0 : index
    %6 = vector.load %arg3[%c0_4, %c0_5] : memref<32x64xbf16, #tpu.memory_space<vmem>>, vector<32x64xbf16>
    %cst_6 = arith.constant dense<0.000000e+00> : vector<32x128xf32>
    %7 = tpu.matmul %6, %5, %cst_6 {dimension_numbers = #tpu.dot_dimension_numbers<[1], [0], [0], [1], [0, 0, 1, 1], [], []>} : vector<32x64xbf16>, vector<64x128xbf16>, vector<32x128xf32> -> vector<32x128xf32>
    %c0_7 = arith.constant 0 : index
    %c0_8 = arith.constant 0 : index
    %8 = vector.load %arg4[%c0_7, %c0_8] : memref<32x1xf32, #tpu.memory_space<vmem>>, vector<32x1xf32>
    %9 = vector.broadcast %8 : vector<32x1xf32> to vector<32x128xf32>
    %10 = arith.addf %7, %9 : vector<32x128xf32>
    %cst_9 = arith.constant 0.000000e+00 : f32
    %11 = vector.broadcast %cst_9 : f32 to vector<32x128xf32>
    %12 = arith.maximumf %10, %11 : vector<32x128xf32>
    %c0_10 = arith.constant 0 : index
    %c0_11 = arith.constant 0 : index
    %13 = vector.load %arg5[%c0_10, %c0_11] : memref<32x1xf32, #tpu.memory_space<vmem>>, vector<32x1xf32>
    %14 = vector.broadcast %13 : vector<32x1xf32> to vector<32x128xf32>
    %15 = arith.mulf %12, %14 : vector<32x128xf32>
    %cst_12 = arith.constant dense<0.000000e+00> : vector<128xf32>
    %16 = vector.multi_reduction <add>, %15, %cst_12 [0] : vector<32x128xf32> to vector<128xf32>
    %17 = vector.shape_cast %16 : vector<128xf32> to vector<1x128xf32>
    %c0_13 = arith.constant 0 : index
    %c0_14 = arith.constant 0 : index
    %18 = vector.load %arg6[%c0_13, %c0_14] : memref<1x1xf32, #tpu.memory_space<vmem>>, vector<1x1xf32>
    %19 = vector.broadcast %18 : vector<1x1xf32> to vector<1x128xf32>
    %20 = arith.addf %17, %19 : vector<1x128xf32>
    %21 = math.tanh %20 : vector<1x128xf32>
    %c0_15 = arith.constant 0 : index
    %c0_16 = arith.constant 0 : index
    %22 = vector.load %arg7[%c0_15, %c0_16] : memref<1x128xf32, #tpu.memory_space<vmem>>, vector<1x128xf32>
    tpu.vector_store %arg7[%c0_15, %c0_16], %21 {strides = array<i32>} : memref<1x128xf32, #tpu.memory_space<vmem>>, vector<1x128xf32>,
    return
  }
  func.func @transform_0(%arg0: i32) -> (i32, i32) {
    %c0_i32 = arith.constant 0 : i32
    %c0_i32_0 = arith.constant 0 : i32
    return %c0_i32, %arg0 : i32, i32
  }
  func.func @transform_1(%arg0: i32) -> (i32, i32) {
    %c0_i32 = arith.constant 0 : i32
    %c0_i32_0 = arith.constant 0 : i32
    %c0_i32_1 = arith.constant 0 : i32
    return %c0_i32, %c0_i32_0 : i32, i32
  }
  func.func @transform_2(%arg0: i32) -> (i32, i32) {
    %c0_i32 = arith.constant 0 : i32
    %c0_i32_0 = arith.constant 0 : i32
    %c0_i32_1 = arith.constant 0 : i32
    return %c0_i32, %c0_i32_0 : i32, i32
  }
  func.func @transform_3(%arg0: i32) -> (i32, i32) {
    %c0_i32 = arith.constant 0 : i32
    %c0_i32_0 = arith.constant 0 : i32
    %c0_i32_1 = arith.constant 0 : i32
    return %c0_i32, %c0_i32_0 : i32, i32
  }
  func.func @transform_4(%arg0: i32) -> (i32, i32) {
    %c0_i32 = arith.constant 0 : i32
    %c0_i32_0 = arith.constant 0 : i32
    %c0_i32_1 = arith.constant 0 : i32
    return %c0_i32, %c0_i32_0 : i32, i32
  }
  func.func @transform_5(%arg0: i32) -> (i32, i32) {
    %c0_i32 = arith.constant 0 : i32
    %c0_i32_0 = arith.constant 0 : i32
    %c0_i32_1 = arith.constant 0 : i32
    return %c0_i32, %c0_i32_0 : i32, i32
  }
  func.func @transform_6(%arg0: i32) -> (i32, i32) {
    %c0_i32 = arith.constant 0 : i32
    %c0_i32_0 = arith.constant 0 : i32
    return %c0_i32, %arg0 : i32, i32
  }
}

</mosaic_0001>

<llo_original>
// kernel: tpu_custom_call.1
$region0: #{tpu_custom_call.1}
  #allocation0 [shape = 'u32[]', space=smem, size = 0x4, offset = 0x4, fixed_abs, tag = 'smem constant byte address 0x4 - core index']
  #allocation1 [shape = 'u32[144,128]{1,0:T(1,128)}', space=vmem, size = 0x12000, scoped, tag = 'internal scratch']
  #allocation2 [shape = 'f32[1,1]{1,0:T(1,128)S(1)}', space=vmem, size = 0x200, scoped, tag = 'scoped memory for tpu_custom_call.1']
  %s0 = inlined_call_operand.vmem [shape: bf16[19,128], index: 0, kind: input, shape index: {}]
  %s1 = inlined_call_operand.vmem [shape: bf16[64,19], index: 1, kind: input, shape index: {}]
  %s2 = inlined_call_operand.vmem [shape: bf16[32,64], index: 2, kind: input, shape index: {}]
  %s3 = inlined_call_operand.vmem [shape: f32[32,1], index: 3, kind: input, shape index: {}]
  %s4 = inlined_call_operand.vmem [shape: f32[32,1], index: 4, kind: input, shape index: {}]
  %s5 = inlined_call_operand.<no memory space> [shape: f32[1,1], index: 5, kind: input, shape index: {}]
  %s6 = inlined_call_operand.hbm [shape: f32[1,128], index: 6, kind: output, shape index: {}]
  %s7 = sld [smem:[#allocation0]]
  $region34: #{tpu_custom_call.1} parent=0
    _
  %s9 = ssub.s32 1, %s7
  %s10 = scalar_select 0, %s9, %s7
  %v11 = vstv %s5
  %12 = vst [vmem:[#allocation2] sm:$0x1] %v11
  $region1: #{tpu_custom_call.1} parent=0
    #allocation3 [shape = 'u8[512]{0}', space=vmem, size = 0x400, scoped, tag = 'output window, operand 0, single buffered']
    #allocation4 [shape = 's32[1]{0}', space=sflag, size = 0x4, scoped, tag = 'scoped memory for tpu_custom_call.1']
    %13 = vsyncpa [#allocation4], 0
    // Predicated region
    $region2: #{tpu_custom_call.1} parent=1 // pred_check
      _
    $region3: #{tpu_custom_call.1} parent=1 // pred_check_branch
      %15 = sbr.rel (0) target = $region5
    $region4: #{tpu_custom_call.1} parent=1 // pred_region
      _
    $region5: #{tpu_custom_call.1} parent=1 // pred_fallthru
      _
    // Predicated region
    $region6: #{tpu_custom_call.1} parent=1 // pred_check
      _
    $region7: #{tpu_custom_call.1} parent=1 // pred_check_branch
      %17 = sbr.rel (0) target = $region9
    $region8: #{tpu_custom_call.1} parent=1 // pred_region
      _
    $region9: #{tpu_custom_call.1} parent=1 // pred_fallthru
      _
    // Predicated region
    $region10: #{tpu_custom_call.1} parent=1 // pred_check
      _
    $region11: #{tpu_custom_call.1} parent=1 // pred_check_branch
      %19 = sbr.rel (0) target = $region13
    $region12: #{tpu_custom_call.1} parent=1 // pred_region
      _
    $region13: #{tpu_custom_call.1} parent=1 // pred_fallthru
      _
    // Predicated region
    $region14: #{tpu_custom_call.1} parent=1 // pred_check
      _
    $region15: #{tpu_custom_call.1} parent=1 // pred_check_branch
      %21 = sbr.rel (0) target = $region17
    $region16: #{tpu_custom_call.1} parent=1 // pred_region
      _
    $region17: #{tpu_custom_call.1} parent=1 // pred_fallthru
      _
    // Predicated region
    $region18: #{tpu_custom_call.1} parent=1 // pred_check
      _
    $region19: #{tpu_custom_call.1} parent=1 // pred_check_branch
      %23 = sbr.rel (0) target = $region21
    $region20: #{tpu_custom_call.1} parent=1 // pred_region
      _
    $region21: #{tpu_custom_call.1} parent=1 // pred_fallthru
      _
    // Predicated region
    $region22: #{tpu_custom_call.1} parent=1 // pred_check
      _
    $region23: #{tpu_custom_call.1} parent=1 // pred_check_branch
      %25 = sbr.rel (0) target = $region25
    $region24: #{tpu_custom_call.1} parent=1 // pred_region
      _
    $region25: #{tpu_custom_call.1} parent=1 // pred_fallthru
      _
    %v27 = vld [vmem:[%s0] sm:$0xf]
    %v28 = vld [vmem:[%s0 + $0x4] sm:$0xf]
    %v29 = vld [vmem:[%s0 + $0x8] sm:$0x3]
    %v30 = vld [vmem:[%s1] sm:$0xf]
    %v31 = vld [vmem:[%s1 + $0x4] sm:$0xf]
    %v32 = vld [vmem:[%s1 + $0x8] sm:$0xf]
    %v33 = vld [vmem:[%s1 + $0xc] sm:$0xf]
    %v34 = vld [vmem:[%s1 + $0x10] sm:$0xf]
    %v35 = vld [vmem:[%s1 + $0x14] sm:$0xf]
    %v36 = vld [vmem:[%s1 + $0x18] sm:$0xf]
    %v37 = vld [vmem:[%s1 + $0x1c] sm:$0xf]
    %v46 = vunpack.c.l.b16 %v30
    %v47 = vunpack.c.l.b16 %v31
    %v48 = vunpack.c.l.b16 %v32
    %v49 = vunpack.c.l.b16 %v33
    %v50 = vunpack.c.l.b16 %v34
    %v51 = vunpack.c.l.b16 %v35
    %v52 = vunpack.c.l.b16 %v36
    %v53 = vunpack.c.l.b16 %v37
    %v54 = vpack.c.b16 %v47, %v46
    %v55 = vpack.c.b16 %v49, %v48
    %v56 = vpack.c.b16 %v51, %v50
    %v57 = vpack.c.b16 %v53, %v52
    %v61 = vunpack.c.l.b16 %v27
    %v62 = vunpack.c.l.b16 %v28
    %v63 = vunpack.c.l.b16 %v29
    %v64 = vpack.c.b16 %v62, %v61
    %v65 = vpack.c.b16 %v63, %v63
    %vm67 = vcmask 154624
    %v69 = vsel %vm67, %v54, 0
    %v72 = vsel %vm67, %v55, 0
    %v75 = vsel %vm67, %v56, 0
    %v78 = vsel %vm67, %v57, 0
    %vm80 = vcmask 1040384
    %vm81 = vcmask 1041408
    %v82 = vsel %vm80, 4294967295, 65535
    %v83 = vsel %vm81, %v82, 0
    %v85 = vand.u32 %v65, %v83
    %87 = vmatprep.subr.bf16.mxu0 0
    %88 = vmatpush1.bf16.msra.mxu0 0
    %89 = vmatprep.subr.bf16.mxu0 0
    %90 = vmatpush1.bf16.msra.mxu0 0
    %91 = vmatprep.subr.bf16.mxu0 0
    %92 = vmatpush1.bf16.msra.mxu0 0
    %93 = vmatprep.subr.bf16.mxu0 0
    %94 = vmatpush1.bf16.msra.mxu0 0
    %95 = vmatprep.subr.bf16.mxu0 0
    %96 = vmatpush1.bf16.msra.mxu0 0
    %97 = vmatprep.subr.bf16.mxu0 0
    %98 = vmatpush1.bf16.msra.mxu0 0
    %99 = vmatprep.subr.bf16.mxu0 0
    %100 = vmatpush1.bf16.msra.mxu0 %v85
    %101 = vmatprep.subr.bf16.mxu0 0
    %102 = vmatpush1.bf16.msra.mxu0 %v64
    %103 = vmatprep.subr.bf16.mxu0 0
    %104 = vmatpush2.bf16.msra.mxu0 0
    %105 = vmatprep.subr.bf16.mxu0 0
    %106 = vmatpush2.bf16.msra.mxu0 0
    %107 = vmatprep.subr.bf16.mxu0 0
    %108 = vmatpush2.bf16.msra.mxu0 0
    %109 = vmatprep.subr.bf16.mxu0 0
    %110 = vmatpush2.bf16.msra.mxu0 0
    %111 = vmatprep.subr.bf16.mxu0 0
    %112 = vmatpush2.bf16.msra.mxu0 0
    %113 = vmatprep.subr.bf16.mxu0 0
    %114 = vmatpush2.bf16.msra.mxu0 0
    %115 = vmatprep.subr.bf16.mxu0 0
    %116 = vmatpush2.bf16.msra.mxu0 0
    %117 = vmatprep.subr.bf16.mxu0 0
    %118 = vmatpush2.bf16.msra.mxu0 0
    %119 = vmatprep.mubr.bf16.mxu0 0
    %120 = vmatmul.mubr.bf16.gmra.mxu0 %v69
    %v121 = vpop.f32.mrf.mxu0
    %v122 = vadd.f32 0.0, %v121
    %v123 = vpop.f32.mrf.mxu0
    %v124 = vpop.f32.mrf.mxu0
    %v125 = vadd.f32 0.0, %v124
    %v126 = vpop.f32.mrf.mxu0
    %127 = vmatprep.mubr.bf16.mxu0 0
    %128 = vmatmul.mubr.bf16.gmra.mxu0 %v72
    %v129 = vpop.f32.mrf.mxu0
    %v130 = vadd.f32 0.0, %v129
    %v131 = vpop.f32.mrf.mxu0
    %v132 = vpop.f32.mrf.mxu0
    %v133 = vadd.f32 0.0, %v132
    %v134 = vpop.f32.mrf.mxu0
    %135 = vmatprep.mubr.bf16.mxu0 0
    %136 = vmatmul.mubr.bf16.gmra.mxu0 %v75
    %v137 = vpop.f32.mrf.mxu0
    %v138 = vadd.f32 0.0, %v137
    %v139 = vpop.f32.mrf.mxu0
    %v140 = vpop.f32.mrf.mxu0
    %v141 = vadd.f32 0.0, %v140
    %v142 = vpop.f32.mrf.mxu0
    %143 = vmatprep.mubr.bf16.mxu0 0
    %144 = vmatmul.mubr.bf16.gmra.mxu0 %v78
    %v145 = vpop.f32.mrf.mxu0
    %v146 = vadd.f32 0.0, %v145
    %v147 = vpop.f32.mrf.mxu0
    %v148 = vpop.f32.mrf.mxu0
    %v149 = vadd.f32 0.0, %v148
    %v150 = vpop.f32.mrf.mxu0
    %151 = vdwg.mxu0
    %v152 = vpack.c.bf16 %v125, %v122
    %v153 = vpack.c.bf16 %v133, %v130
    %v154 = vpack.c.bf16 %v141, %v138
    %v155 = vpack.c.bf16 %v149, %v146
    %v156 = vmax.bf16 %v152, 0
    %v157 = vmax.bf16 %v153, 0
    %v158 = vmax.bf16 %v154, 0
    %v159 = vmax.bf16 %v155, 0
    %v160 = vld [vmem:[%s2] sm:$0xf]
    %v161 = vld [vmem:[%s2 + $0x4] sm:$0xf]
    %v162 = vld [vmem:[%s2 + $0x8] sm:$0xf]
    %v163 = vld [vmem:[%s2 + $0xc] sm:$0xf]
    %v164 = vld [vmem:[%s3] sm:$0xff]
    %v165 = vld [vmem:[%s3 + $0x8] sm:$0xff]
    %v166 = vld [vmem:[%s3 + $0x10] sm:$0xff]
    %v167 = vld [vmem:[%s3 + $0x18] sm:$0xff]
    %169 = vset.pattern.permute.xlu0 0
    %170 = vperm.xlu0 %169, %v164
    %v171 = vpop.permute.xlu0 %170
    %174 = vset.pattern.permute.xlu0 0
    %175 = vperm.xlu0 %174, %v165
    %v176 = vpop.permute.xlu0 %175
    %179 = vset.pattern.permute.xlu0 0
    %180 = vperm.xlu0 %179, %v166
    %v181 = vpop.permute.xlu0 %180
    %184 = vset.pattern.permute.xlu0 0
    %185 = vperm.xlu0 %184, %v167
    %v186 = vpop.permute.xlu0 %185
    %v192 = vunpack.c.l.b16 %v160
    %v193 = vunpack.c.l.b16 %v161
    %v194 = vunpack.c.l.b16 %v162
    %v195 = vunpack.c.l.b16 %v163
    %v196 = vpack.c.b16 %v193, %v192
    %v197 = vpack.c.b16 %v195, %v194
    %vm198 = vcmask 523264
    %v200 = vsel %vm198, %v196, 0
    %v203 = vsel %vm198, %v197, 0
    %205 = vmatprep.subr.bf16.mxu0 0
    %206 = vmatpush1.bf16.msra.mxu0 0
    %207 = vmatprep.subr.bf16.mxu0 0
    %208 = vmatpush1.bf16.msra.mxu0 0
    %209 = vmatprep.subr.bf16.mxu0 0
    %210 = vmatpush1.bf16.msra.mxu0 0
    %211 = vmatprep.subr.bf16.mxu0 0
    %212 = vmatpush1.bf16.msra.mxu0 0
    %213 = vmatprep.subr.bf16.mxu0 0
    %214 = vmatpush1.bf16.msra.mxu0 %v159
    %215 = vmatprep.subr.bf16.mxu0 0
    %216 = vmatpush1.bf16.msra.mxu0 %v158
    %217 = vmatprep.subr.bf16.mxu0 0
    %218 = vmatpush1.bf16.msra.mxu0 %v157
    %219 = vmatprep.subr.bf16.mxu0 0
    %220 = vmatpush1.bf16.msra.mxu0 %v156
    %221 = vmatprep.subr.bf16.mxu0 0
    %222 = vmatpush2.bf16.msra.mxu0 0
    %223 = vmatprep.subr.bf16.mxu0 0
    %224 = vmatpush2.bf16.msra.mxu0 0
    %225 = vmatprep.subr.bf16.mxu0 0
    %226 = vmatpush2.bf16.msra.mxu0 0
    %227 = vmatprep.subr.bf16.mxu0 0
    %228 = vmatpush2.bf16.msra.mxu0 0
    %229 = vmatprep.subr.bf16.mxu0 0
    %230 = vmatpush2.bf16.msra.mxu0 0
    %231 = vmatprep.subr.bf16.mxu0 0
    %232 = vmatpush2.bf16.msra.mxu0 0
    %233 = vmatprep.subr.bf16.mxu0 0
    %234 = vmatpush2.bf16.msra.mxu0 0
    %235 = vmatprep.subr.bf16.mxu0 0
    %236 = vmatpush2.bf16.msra.mxu0 0
    %237 = vmatprep.mubr.bf16.mxu0 0
    %238 = vmatmul.mubr.bf16.gmra.mxu0 %v200
    %v239 = vpop.f32.mrf.mxu0
    %v240 = vadd.f32 %v171, %v239
    %v241 = vpop.f32.mrf.mxu0
    %v242 = vpop.f32.mrf.mxu0
    %v243 = vadd.f32 %v176, %v242
    %v244 = vpop.f32.mrf.mxu0
    %245 = vmatprep.mubr.bf16.mxu0 0
    %246 = vmatmul.mubr.bf16.gmra.mxu0 %v203
    %v247 = vpop.f32.mrf.mxu0
    %v248 = vadd.f32 %v181, %v247
    %v249 = vpop.f32.mrf.mxu0
    %v250 = vpop.f32.mrf.mxu0
    %v251 = vadd.f32 %v186, %v250
    %v252 = vpop.f32.mrf.mxu0
    %253 = vdwg.mxu0
    %v254 = vmax.f32 %v240, 0.0
    %v255 = vmax.f32 %v243, 0.0
    %v256 = vmax.f32 %v248, 0.0
    %v257 = vmax.f32 %v251, 0.0
    %v258 = vld [vmem:[%s4] sm:$0xff]
    %v259 = vld [vmem:[%s4 + $0x8] sm:$0xff]
    %v260 = vld [vmem:[%s4 + $0x10] sm:$0xff]
    %v261 = vld [vmem:[%s4 + $0x18] sm:$0xff]
    %263 = vset.pattern.permute.xlu0 0
    %264 = vperm.xlu0 %263, %v258
    %v265 = vpop.permute.xlu0 %264
    %268 = vset.pattern.permute.xlu0 0
    %269 = vperm.xlu0 %268, %v259
    %v270 = vpop.permute.xlu0 %269
    %273 = vset.pattern.permute.xlu0 0
    %274 = vperm.xlu0 %273, %v260
    %v275 = vpop.permute.xlu0 %274
    %278 = vset.pattern.permute.xlu0 0
    %279 = vperm.xlu0 %278, %v261
    %v280 = vpop.permute.xlu0 %279
    %v282 = vmul.f32 %v254, %v265
    %v283 = vmul.f32 %v255, %v270
    %v284 = vmul.f32 %v256, %v275
    %v285 = vmul.f32 %v257, %v280
    %v286 = vadd.f32 %v282, %v283
    %v287 = vadd.f32 %v286, %v284
    %v288 = vadd.f32 %v287, %v285
    %v289 = vrot.slane %v288, 4
    %v290 = vadd.f32 %v288, %v289
    %v291 = vrot.slane %v290, 2
    %v292 = vadd.f32 %v290, %v291
    %v293 = vrot.slane %v292, 1
    %v294 = vadd.f32 %v292, %v293
    %v295 = vld [vmem:[#allocation2] sm:$0x1]
    %297 = vset.pattern.permute.xlu0 0
    %298 = vperm.xlu0 %297, %v295
    %v299 = vpop.permute.xlu0 %298
    %v301 = vlaneseq
    %v302 = vshrl.u32 %v301, 7
    %v303 = vsub.s32 0, %v302
    %v304 = vrot.slane %v299, %v303
    %v305 = vadd.f32 %v294, %v304
    %v306 = vtanh.pop %v305
    %307 = vst [vmem:[#allocation3] sm:$0x1] %v306
    // Predicated region
    $region26: #{tpu_custom_call.1} parent=1 // pred_check
      _
    $region27: #{tpu_custom_call.1} parent=1 // pred_check_branch
      %309 = sbr.rel (0) target = $region29
    $region28: #{tpu_custom_call.1} parent=1 // pred_region
      %s311 = ssub.s32 16, 16
      %312 = vsyncadd [#allocation4], %s311
      %s314 = sshll.u32 [#allocation3], 4
      %s315 = int_to_ptr.vmem [resolvable:$true] %s314
      %317 = dma.vmem_to_hbm [thread:$0]  %s315, 16, %s6, [#allocation4]
    $region29: #{tpu_custom_call.1} parent=1 // pred_fallthru
      _
    // Predicated region
    $region30: #{tpu_custom_call.1} parent=1 // pred_check
      _
    $region31: #{tpu_custom_call.1} parent=1 // pred_check_branch
      %319 = sbr.rel (0) target = $region33
    $region32: #{tpu_custom_call.1} parent=1 // pred_region
      %320 = dma.done [#allocation4], 16
    $region33: #{tpu_custom_call.1} parent=1 // pred_fallthru
      _
    %321 = vsyncpa [#allocation4], 1

</llo_original>
